<compile_context>
chip_gen: v5e
topology: v5e:2x2
jax: 0.10.0
libtpu: 0.0.40
codegen_flags: <defaults>
</compile_context>

<pallas_src>
import jax
import jax.numpy as jnp
from jax.experimental import pallas as pl
from jax.experimental.pallas import tpu as pltpu

_LANE = 128       # lane width (last dim)
_MAX_COLS = 1024  # cap on lane-dense column width


def _affine_kernel(x_ref, o_ref):
    # ((x + 2) * 3) - 1 - 1  ==  x * 3 + 4
    o_ref[...] = (x_ref[...] * 3 + 4).astype(o_ref.dtype)


def _sublane_for_itemsize(itemsize):
    # f32 -> 8, bf16 -> 16, int8/fp8 -> 32
    return max(8, 32 // max(1, itemsize))


def _block_bytes_and_vmem_limit():
    """Per-generation block sizing.  Conservative on unknown / older chips."""
    try:
        kind = jax.devices()[0].device_kind.lower()
    except Exception:
        kind = ""
    if ("v6" in kind) or ("v7" in kind):
        # 4 MiB blocks; in+out double-buffered = 16 MiB < 32 MiB scoped VMEM.
        return 4 << 20, 32 << 20
    # v5e scoped default is 16 MiB and HBM is slower: 2 MiB blocks are plenty.
    return 2 << 20, None


def pt_module_forward(x):
    """Elementwise PtModule.forward for an arbitrary-shaped float array."""
    orig_shape = x.shape
    dtype = x.dtype
    itemsize = dtype.itemsize
    sublane = _sublane_for_itemsize(itemsize)
    block_bytes, vmem_limit = _block_bytes_and_vmem_limit()

    flat = x.reshape(-1)
    n = flat.shape[0]
    if n == 0:
        return x

    # --- lane-dense column width --------------------------------------
    if n % _LANE == 0:
        # Largest multiple of 128 dividing n, capped at _MAX_COLS -> zero padding.
        cols = _LANE
        for k in range(_MAX_COLS // _LANE, 0, -1):
            c = k * _LANE
            if n % c == 0:
                cols = c
                break
        padded = False
    else:
        # Uncommon fallback: pad the tail up to a full 128-wide row.
        cols = _LANE
        padded = True

    rows = pl.cdiv(n, cols)
    if padded:
        total = rows * cols
        if total != n:
            flat = jnp.pad(flat, (0, total - n))
    x2d = flat.reshape(rows, cols)

    # --- block rows: byte-sized, dtype-aware sublane --------------------
    if rows <= sublane:
        tile_rows = rows  # equals full array dim -> allowed by (8,128) rule
    else:
        target = max(sublane, block_bytes // (cols * itemsize))
        tile_rows = (target // sublane) * sublane
        tile_rows = max(sublane, min(tile_rows, pl.cdiv(rows, sublane) * sublane))
        # Guarantee >=2 grid steps so the v7x second TensorCore has work.
        if tile_rows >= rows and rows >= 2 * sublane:
            half = pl.cdiv(pl.cdiv(rows, 2), sublane) * sublane
            tile_rows = min(tile_rows, half)

    grid = (pl.cdiv(rows, tile_rows),)  # ragged last row-block is masked by Pallas

    cp_kwargs = dict(dimension_semantics=("parallel",))
    if vmem_limit is not None:
        cp_kwargs["vmem_limit_bytes"] = vmem_limit

    out2d = pl.pallas_call(
        _affine_kernel,
        out_shape=jax.ShapeDtypeStruct((rows, cols), dtype),
        grid=grid,
        in_specs=[pl.BlockSpec((tile_rows, cols), lambda i: (i, 0))],
        out_specs=pl.BlockSpec((tile_rows, cols), lambda i: (i, 0)),
        compiler_params=pltpu.CompilerParams(**cp_kwargs),
    )(x2d)

    out_flat = out2d.reshape(-1)
    if padded and out_flat.shape[0] != n:
        out_flat = out_flat[:n]
    return out_flat.reshape(orig_shape)


if __name__ == "__main__":
    key = jax.random.PRNGKey(0)
    # Small NCHW-like input consistent with a generic elementwise module.
    B, C, H, W = 2, 4, 16, 16
    x_nchw = jax.random.normal(key, (B, C, H, W), dtype=jnp.float32)

    out = pt_module_forward(x_nchw)
    jax.block_until_ready(out)

    # Reference: exact sequential order from the PyTorch module.
    ref = (x_nchw + 2.0) * 3.0 - 1.0 - 1.0
    assert out.shape == ref.shape
    assert jnp.allclose(out, ref, atol=1e-5, rtol=1e-6), "mismatch vs reference"
    print("KERNEL_OK")
</pallas_src>

<mosaic_0001>
module attributes {stable_mosaic.version = 11 : i64} {
  func.func @_affine_kernel(%arg0: i32, %arg1: memref<2x1024xf32, #tpu.memory_space<vmem>>, %arg2: memref<2x1024xf32, #tpu.memory_space<vmem>>) attributes {dimension_semantics = [#tpu.dimension_semantics<parallel>], iteration_bounds = array<i64: 1>, scalar_prefetch = 0 : i64, scratch_operands = 0 : i64, tpu.core_type = #tpu.core_type<tc>, window_params = [{transform_indices = @transform_0, window_bounds = array<i64: 2, 1024>}, {transform_indices = @transform_1, window_bounds = array<i64: 2, 1024>}]} {
    %c0 = arith.constant 0 : index
    %c0_0 = arith.constant 0 : index
    %0 = vector.load %arg1[%c0, %c0_0] : memref<2x1024xf32, #tpu.memory_space<vmem>>, vector<2x1024xf32>
    %cst = arith.constant 3.000000e+00 : f32
    %1 = vector.broadcast %cst : f32 to vector<2x1024xf32>
    %2 = arith.mulf %0, %1 : vector<2x1024xf32>
    %cst_1 = arith.constant 4.000000e+00 : f32
    %3 = vector.broadcast %cst_1 : f32 to vector<2x1024xf32>
    %4 = arith.addf %2, %3 : vector<2x1024xf32>
    %c0_2 = arith.constant 0 : index
    %c0_3 = arith.constant 0 : index
    %5 = vector.load %arg2[%c0_2, %c0_3] : memref<2x1024xf32, #tpu.memory_space<vmem>>, vector<2x1024xf32>
    tpu.vector_store %arg2[%c0_2, %c0_3], %4 {strides = array<i32>} : memref<2x1024xf32, #tpu.memory_space<vmem>>, vector<2x1024xf32>,
    return
  }
  func.func @transform_0(%arg0: i32) -> (i32, i32) {
    %c0_i32 = arith.constant 0 : i32
    %c0_i32_0 = arith.constant 0 : i32
    return %arg0, %c0_i32 : i32, i32
  }
  func.func @transform_1(%arg0: i32) -> (i32, i32) {
    %c0_i32 = arith.constant 0 : i32
    %c0_i32_0 = arith.constant 0 : i32
    return %arg0, %c0_i32 : i32, i32
  }
}

</mosaic_0001>

<llo_original>
// kernel: tpu_custom_call.1
$region0: #{tpu_custom_call.1}
  #allocation0 [shape = 'u32[]', space=smem, size = 0x4, offset = 0x4, fixed_abs, tag = 'smem constant byte address 0x4 - core index']
  #allocation1 [shape = 'u32[72,128]{1,0:T(1,128)}', space=vmem, size = 0x9000, scoped, tag = 'internal scratch']
  %s0 = inlined_call_operand.hbm [shape: f32[2,1024], index: 0, kind: input, shape index: {}]
  %s1 = inlined_call_operand.hbm [shape: f32[2,1024], index: 1, kind: output, shape index: {}]
  %s2 = sld [smem:[#allocation0]]
  $region18: #{tpu_custom_call.1} parent=0
    _
  %s4 = ssub.s32 1, %s2
  %s5 = scalar_select 0, %s4, %s2
  $region1: #{tpu_custom_call.1} parent=0
    #allocation2 [shape = 'u8[8192]{0}', space=vmem, size = 0x2000, scoped, tag = 'input window, operand 0, single buffered']
    #allocation3 [shape = 's32[1]{0}', space=sflag, size = 0x4, scoped, tag = 'scoped memory for tpu_custom_call.1']
    #allocation4 [shape = 's32[1]{0}', space=sflag, size = 0x4, scoped, tag = 'scoped memory for tpu_custom_call.1']
    #allocation5 [shape = 'u8[8192]{0}', space=vmem, size = 0x2000, scoped, tag = 'output window, operand 0, single buffered']
    %6 = vsyncpa [#allocation3], 0
    %7 = vsyncpa [#allocation4], 0
    // Predicated region
    $region2: #{tpu_custom_call.1} parent=1 // pred_check
      _
    $region3: #{tpu_custom_call.1} parent=1 // pred_check_branch
      %9 = sbr.rel (0) target = $region5
    $region4: #{tpu_custom_call.1} parent=1 // pred_region
      %11 = vsyncadd [#allocation3], 0
      %s13 = sshll.u32 %s0, 4
      %s14 = int_to_ptr.hbm [resolvable:$true] %s13
      %s15 = sshll.u32 [#allocation2], 4
      %s16 = int_to_ptr.vmem [resolvable:$true] %s15
      %18 = dma.hbm_to_vmem [thread:$0]  %s14, 256, %s16, [#allocation3]
    $region5: #{tpu_custom_call.1} parent=1 // pred_fallthru
      _
    // Predicated region
    $region6: #{tpu_custom_call.1} parent=1 // pred_check
      _
    $region7: #{tpu_custom_call.1} parent=1 // pred_check_branch
      %20 = sbr.rel (0) target = $region9
    $region8: #{tpu_custom_call.1} parent=1 // pred_region
      %22 = dma.done [#allocation3], 256
    $region9: #{tpu_custom_call.1} parent=1 // pred_fallthru
      _
    %v23 = vld [vmem:[#allocation2] sm:$0xff]
    %v24 = vld [vmem:[#allocation2 + $0x8] sm:$0xff]
    %v25 = vmul.f32 %v23, 3.0
    %v26 = vmul.f32 %v24, 3.0
    %v27 = vadd.f32 %v25, 4.0
    %v28 = vadd.f32 %v26, 4.0
    %29 = vst [vmem:[#allocation5] sm:$0xff] %v27
    %30 = vst [vmem:[#allocation5 + $0x8] sm:$0xff] %v28
    // Predicated region
    $region10: #{tpu_custom_call.1} parent=1 // pred_check
      _
    $region11: #{tpu_custom_call.1} parent=1 // pred_check_branch
      %32 = sbr.rel (0) target = $region13
    $region12: #{tpu_custom_call.1} parent=1 // pred_region
      %34 = vsyncadd [#allocation4], 0
      %s36 = sshll.u32 [#allocation5], 4
      %s37 = int_to_ptr.vmem [resolvable:$true] %s36
      %s38 = sshll.u32 %s1, 4
      %s39 = int_to_ptr.hbm [resolvable:$true] %s38
      %41 = dma.vmem_to_hbm [thread:$0]  %s37, 256, %s39, [#allocation4]
    $region13: #{tpu_custom_call.1} parent=1 // pred_fallthru
      _
    // Predicated region
    $region14: #{tpu_custom_call.1} parent=1 // pred_check
      _
    $region15: #{tpu_custom_call.1} parent=1 // pred_check_branch
      %43 = sbr.rel (0) target = $region17
    $region16: #{tpu_custom_call.1} parent=1 // pred_region
      %45 = dma.done [#allocation4], 256
    $region17: #{tpu_custom_call.1} parent=1 // pred_fallthru
      _
    %46 = vsyncpa [#allocation3], 1
    %47 = vsyncpa [#allocation4], 1

</llo_original>
